<compile_context>
chip_gen: v7x
topology: tpu7x:2x2x1
jax: 0.10.0
libtpu: 0.0.40
codegen_flags: <defaults>
</compile_context>

<pallas_src>
import math
from functools import partial

import numpy as np
import jax
import jax.numpy as jnp
from jax.experimental import pallas as pl
from jax.experimental.pallas import tpu as pltpu


def sphere_tables(H, W):
    """Tiny 1-D trig tables (always float32) describing the xyz sphere.

    Returns cos_t, sin_t of shape (H, 1) and cos_p, sin_p of shape (1, W).
    If EPC is called repeatedly with the same (H, W), hoist this call and pass
    the tables to epc_forward(tables=...).
    """
    i = jnp.arange(H, dtype=jnp.float32)
    j = jnp.arange(W, dtype=jnp.float32)
    theta = -math.pi * (i / float(H - 1) - 0.5)               # (H,)
    phi = math.pi * (2.0 * j / float(W - 1) - 1.0)            # (W,)
    cos_t = jnp.cos(theta)[:, None]                           # (H, 1)
    sin_t = jnp.sin(theta)[:, None]                           # (H, 1)
    cos_p = jnp.cos(phi)[None, :]                             # (1, W)
    sin_p = jnp.sin(phi)[None, :]                             # (1, W)
    return cos_t, sin_t, cos_p, sin_p


def _divisors(n):
    return [d for d in range(1, n + 1) if n % d == 0]


def _sublane(itemsize):
    # f32 -> 8, bf16 -> 16, int8 -> 32 sublane packing granularity.
    return max(8, 32 // max(1, int(itemsize)))


def _vmem_budget():
    """Generation-aware (working-set budget, vmem_limit_bytes, min grid steps)."""
    cap = None
    try:
        cap = int(pltpu.get_tpu_info().vmem_capacity_bytes)
    except Exception:
        cap = None
    if cap is not None and cap > 80 * 1024 * 1024:
        # v5e / v6e: 128 MiB physical VMEM, single TensorCore per chip.
        return 48 * 1024 * 1024, 96 * 1024 * 1024, 1
    # v7x (64 MiB per TC, 2 TCs) or unknown: conservative tiles, keep both
    # TensorCores fed by guaranteeing >= 4 parallel grid steps when possible.
    return 16 * 1024 * 1024, 40 * 1024 * 1024, 4


def _pick_tiles(B, H, W, in_itemsize, out_itemsize, budget, min_steps):
    """Pick (TB, TH, TW). Prefers full W (contiguous DMAs), tiles H, batches
    small images; falls back to W-tiling only if a minimal H block is huge."""
    sub = max(_sublane(in_itemsize), _sublane(out_itemsize))
    th_cands = sorted({d for d in _divisors(H) if d % sub == 0} | {H})
    tw_cands = sorted({d for d in _divisors(W) if d % 128 == 0} | {W})
    tb_cands = _divisors(B)
    per_elem = in_itemsize + 3 * out_itemsize       # depth read + 3-ch write
    table_bytes = (2 * H + 2 * W) * 4               # resident trig tables

    best_fit = None     # best among candidates that fit the budget
    smallest = None     # absolute smallest working set (last-resort fallback)
    for tb in tb_cands:
        for th in th_cands:
            for tw in tw_cands:
                step_bytes = tb * th * tw * per_elem
                working = 2 * step_bytes + table_bytes      # double-buffered
                steps = (B // tb) * (H // th) * (W // tw)
                if smallest is None or working < smallest[0]:
                    smallest = (working, (tb, th, tw))
                if working > budget:
                    continue
                # Prefer: enough parallel steps, then full-W (contiguous DMA),
                # then the largest per-step HBM traffic (fewest grid steps).
                key = (min(steps, min_steps), tw == W, step_bytes)
                if best_fit is None or key > best_fit[0]:
                    best_fit = (key, (tb, th, tw))
    return best_fit[1] if best_fit is not None else smallest[1]


def _epc_kernel(cos_t_ref, sin_t_ref, cos_p_ref, sin_p_ref, d_ref, o_ref,
                *, yz_swap, th, tw, h_tiled, w_tiled):
    # Tables are full VMEM residents; slice them to the current tile.
    if h_tiled:
        h0 = pl.multiple_of(pl.program_id(1) * th, 8)
        cos_t = cos_t_ref[pl.ds(h0, th), :]          # (TH, 1)
        sin_t = sin_t_ref[pl.ds(h0, th), :]
    else:
        cos_t = cos_t_ref[...]
        sin_t = sin_t_ref[...]
    if w_tiled:
        w0 = pl.multiple_of(pl.program_id(2) * tw, 128)
        cos_p = cos_p_ref[:, pl.ds(w0, tw)]          # (1, TW)
        sin_p = sin_p_ref[:, pl.ds(w0, tw)]
    else:
        cos_p = cos_p_ref[...]
        sin_p = sin_p_ref[...]

    d = d_ref[...].astype(jnp.float32)               # (TB, TH, TW)
    d_cos_t = d * cos_t                              # shared by x and z
    out_dtype = o_ref.dtype
    # Lane-dense (TB, TH, TW) stores, one per output channel.
    o_ref[:, 0, :, :] = (d_cos_t * cos_p).astype(out_dtype)   # cos(phi)cos(th)d
    if yz_swap:
        o_ref[:, 1, :, :] = (d * sin_t).astype(out_dtype)     # sin(theta) d
        o_ref[:, 2, :, :] = (d_cos_t * sin_p).astype(out_dtype)
    else:
        o_ref[:, 1, :, :] = (d_cos_t * sin_p).astype(out_dtype)
        o_ref[:, 2, :, :] = (d * sin_t).astype(out_dtype)


def epc_forward(batch, YZ_swap=True, out_dtype=None, tables=None, tiles=None):
    """batch: (B, H, W) depth -> (B, 3, H, W) euclidean point cloud.

    out_dtype defaults to batch.dtype; pass jnp.bfloat16 to halve the
    (dominant) output write traffic when downstream consumers accept bf16.
    """
    B, H, W = batch.shape
    assert H >= 2 and W >= 2, "EPC requires H >= 2 and W >= 2"
    out_dtype = batch.dtype if out_dtype is None else np.dtype(out_dtype)
    if tables is None:
        tables = sphere_tables(H, W)
    cos_t, sin_t, cos_p, sin_p = tables

    budget, vmem_limit, min_steps = _vmem_budget()
    if tiles is None:
        TB, TH, TW = _pick_tiles(B, H, W, batch.dtype.itemsize,
                                 np.dtype(out_dtype).itemsize,
                                 budget, min_steps)
    else:
        TB, TH, TW = tiles
    assert B % TB == 0 and H % TH == 0 and W % TW == 0
    if TH < H:
        assert TH % 8 == 0, "tiled H block must be a multiple of 8"
    if TW < W:
        assert TW % 128 == 0, "tiled W block must be a multiple of 128"

    n_bt, n_ht, n_wt = B // TB, H // TH, W // TW
    grid = (n_bt, n_ht, n_wt)

    vmem_resident = pl.BlockSpec(memory_space=pltpu.MemorySpace.VMEM)

    out = pl.pallas_call(
        partial(_epc_kernel, yz_swap=YZ_swap, th=TH, tw=TW,
                h_tiled=(n_ht > 1), w_tiled=(n_wt > 1)),
        out_shape=jax.ShapeDtypeStruct((B, 3, H, W), out_dtype),
        grid_spec=pltpu.PrefetchScalarGridSpec(
            num_scalar_prefetch=0,
            grid=grid,
            in_specs=[
                vmem_resident,                                   # cos(theta)
                vmem_resident,                                   # sin(theta)
                vmem_resident,                                   # cos(phi)
                vmem_resident,                                   # sin(phi)
                pl.BlockSpec((TB, TH, TW), lambda b, h, w: (b, h, w)),
            ],
            out_specs=pl.BlockSpec((TB, 3, TH, TW),
                                   lambda b, h, w: (b, 0, h, w)),
        ),
        compiler_params=pltpu.CompilerParams(
            dimension_semantics=("parallel", "parallel", "parallel"),
            vmem_limit_bytes=vmem_limit,
        ),
    )(cos_t, sin_t, cos_p, sin_p, batch)
    return out


def epc_forward_ref(batch, YZ_swap=True, out_dtype=None):
    """Pure-JAX reference matching the PyTorch forward (table in float32)."""
    B, H, W = batch.shape
    out_dtype = batch.dtype if out_dtype is None else np.dtype(out_dtype)
    cos_t, sin_t, cos_p, sin_p = sphere_tables(H, W)
    p0 = cos_p * cos_t                                   # (H, W)
    if YZ_swap:
        p1 = jnp.broadcast_to(sin_t, (H, W))
        p2 = sin_p * cos_t
    else:
        p1 = sin_p * cos_t
        p2 = jnp.broadcast_to(sin_t, (H, W))
    sph = jnp.stack([p0, p1, p2], axis=0)                # (3, H, W) f32
    d = batch.astype(jnp.float32)[:, None, :, :]         # (B, 1, H, W)
    return (sph[None] * d).astype(out_dtype)             # (B, 3, H, W)


if __name__ == "__main__":
    key = jax.random.PRNGKey(0)

    def check(batch, yz_swap=True, tiles=None):
        out = jax.block_until_ready(
            epc_forward(batch, YZ_swap=yz_swap, tiles=tiles))
        ref = epc_forward_ref(batch, YZ_swap=yz_swap)
        assert out.shape == ref.shape, (out.shape, ref.shape)
        assert out.dtype == ref.dtype, (out.dtype, ref.dtype)
        err = float(jnp.max(jnp.abs(out.astype(jnp.float32)
                                    - ref.astype(jnp.float32))))
        assert jnp.allclose(out, ref, atol=1e-5, rtol=1e-5), err

    k1, k2, k3 = jax.random.split(key, 3)

    # 1) Aligned small shape, auto-picked tiles, both YZ_swap settings.
    b1 = jax.random.uniform(k1, (2, 16, 256), dtype=jnp.float32,
                            minval=0.5, maxval=10.0)
    check(b1, yz_swap=True)
    check(b1, yz_swap=False)

    # 2) Non-128-multiple W and non-8-multiple H: full-extent H/W blocks.
    b2 = jax.random.uniform(k2, (3, 12, 200), dtype=jnp.float32,
                            minval=0.5, maxval=10.0)
    check(b2, yz_swap=True)

    # 3) Force H-, W- and batch-tiling to exercise the in-kernel table slicing.
    b3 = jax.random.uniform(k3, (2, 32, 256), dtype=jnp.float32,
                            minval=0.5, maxval=10.0)
    check(b3, yz_swap=True, tiles=(1, 16, 128))

    print("KERNEL_OK")
</pallas_src>

<mosaic_0001>
module attributes {stable_mosaic.version = 11 : i64} {
  func.func @_epc_kernel(%arg0: i32, %arg1: i32, %arg2: i32, %arg3: memref<16x1xf32, #tpu.memory_space<vmem>>, %arg4: memref<16x1xf32, #tpu.memory_space<vmem>>, %arg5: memref<1x256xf32, #tpu.memory_space<vmem>>, %arg6: memref<1x256xf32, #tpu.memory_space<vmem>>, %arg7: memref<1x8x256xf32, #tpu.memory_space<vmem>>, %arg8: memref<1x3x8x256xf32, #tpu.memory_space<vmem>>) attributes {dimension_semantics = [#tpu.dimension_semantics<parallel>, #tpu.dimension_semantics<parallel>, #tpu.dimension_semantics<parallel>], iteration_bounds = array<i64: 2, 2, 1>, scalar_prefetch = 0 : i64, scratch_operands = 0 : i64, tpu.core_type = #tpu.core_type<tc>, window_params = [{pipeline_mode = #tpu.pipeline_mode<synchronous>, transform_indices = @transform_0, window_bounds = array<i64: 16, 1>}, {pipeline_mode = #tpu.pipeline_mode<synchronous>, transform_indices = @transform_1, window_bounds = array<i64: 16, 1>}, {pipeline_mode = #tpu.pipeline_mode<synchronous>, transform_indices = @transform_2, window_bounds = array<i64: 1, 256>}, {pipeline_mode = #tpu.pipeline_mode<synchronous>, transform_indices = @transform_3, window_bounds = array<i64: 1, 256>}, {transform_indices = @transform_4, window_bounds = array<i64: 1, 8, 256>}, {transform_indices = @transform_5, window_bounds = array<i64: 1, 3, 8, 256>}]} {
    %c8_i32 = arith.constant 8 : i32
    %0 = arith.muli %arg1, %c8_i32 : i32
    %1 = tpu.assume_multiple %0, 8 : i32
    %2 = arith.index_cast %1 : i32 to index
    %c0 = arith.constant 0 : index
    %3 = vector.load %arg3[%2, %c0] : memref<16x1xf32, #tpu.memory_space<vmem>>, vector<8x1xf32>
    %4 = arith.index_cast %1 : i32 to index
    %c0_0 = arith.constant 0 : index
    %5 = vector.load %arg4[%4, %c0_0] : memref<16x1xf32, #tpu.memory_space<vmem>>, vector<8x1xf32>
    %c0_1 = arith.constant 0 : index
    %c0_2 = arith.constant 0 : index
    %6 = vector.load %arg5[%c0_1, %c0_2] : memref<1x256xf32, #tpu.memory_space<vmem>>, vector<1x256xf32>
    %c0_3 = arith.constant 0 : index
    %c0_4 = arith.constant 0 : index
    %7 = vector.load %arg6[%c0_3, %c0_4] : memref<1x256xf32, #tpu.memory_space<vmem>>, vector<1x256xf32>
    %c0_5 = arith.constant 0 : index
    %c0_6 = arith.constant 0 : index
    %c0_7 = arith.constant 0 : index
    %8 = vector.load %arg7[%c0_5, %c0_6, %c0_7] : memref<1x8x256xf32, #tpu.memory_space<vmem>>, vector<1x8x256xf32>
    %9 = vector.shape_cast %3 : vector<8x1xf32> to vector<1x8x1xf32>
    %10 = vector.broadcast %9 : vector<1x8x1xf32> to vector<1x8x256xf32>
    %11 = arith.mulf %8, %10 : vector<1x8x256xf32>
    %12 = vector.shape_cast %6 : vector<1x256xf32> to vector<1x1x256xf32>
    %13 = vector.broadcast %12 : vector<1x1x256xf32> to vector<1x8x256xf32>
    %14 = arith.mulf %11, %13 : vector<1x8x256xf32>
    %c0_8 = arith.constant 0 : index
    %c0_9 = arith.constant 0 : index
    %c0_10 = arith.constant 0 : index
    %c0_11 = arith.constant 0 : index
    %15 = vector.load %arg8[%c0_8, %c0_9, %c0_10, %c0_11] : memref<1x3x8x256xf32, #tpu.memory_space<vmem>>, vector<1x1x8x256xf32>
    %16 = vector.shape_cast %15 : vector<1x1x8x256xf32> to vector<1x8x256xf32>
    %17 = vector.shape_cast %14 : vector<1x8x256xf32> to vector<1x1x8x256xf32>
    tpu.vector_store %arg8[%c0_8, %c0_9, %c0_10, %c0_11], %17 {strides = array<i32>} : memref<1x3x8x256xf32, #tpu.memory_space<vmem>>, vector<1x1x8x256xf32>,
    %18 = vector.shape_cast %5 : vector<8x1xf32> to vector<1x8x1xf32>
    %19 = vector.broadcast %18 : vector<1x8x1xf32> to vector<1x8x256xf32>
    %20 = arith.mulf %8, %19 : vector<1x8x256xf32>
    %c0_12 = arith.constant 0 : index
    %c1 = arith.constant 1 : index
    %c0_13 = arith.constant 0 : index
    %c0_14 = arith.constant 0 : index
    %21 = vector.load %arg8[%c0_12, %c1, %c0_13, %c0_14] : memref<1x3x8x256xf32, #tpu.memory_space<vmem>>, vector<1x1x8x256xf32>
    %22 = vector.shape_cast %21 : vector<1x1x8x256xf32> to vector<1x8x256xf32>
    %23 = vector.shape_cast %20 : vector<1x8x256xf32> to vector<1x1x8x256xf32>
    tpu.vector_store %arg8[%c0_12, %c1, %c0_13, %c0_14], %23 {strides = array<i32>} : memref<1x3x8x256xf32, #tpu.memory_space<vmem>>, vector<1x1x8x256xf32>,
    %24 = vector.shape_cast %7 : vector<1x256xf32> to vector<1x1x256xf32>
    %25 = vector.broadcast %24 : vector<1x1x256xf32> to vector<1x8x256xf32>
    %26 = arith.mulf %11, %25 : vector<1x8x256xf32>
    %c0_15 = arith.constant 0 : index
    %c2 = arith.constant 2 : index
    %c0_16 = arith.constant 0 : index
    %c0_17 = arith.constant 0 : index
    %27 = vector.load %arg8[%c0_15, %c2, %c0_16, %c0_17] : memref<1x3x8x256xf32, #tpu.memory_space<vmem>>, vector<1x1x8x256xf32>
    %28 = vector.shape_cast %27 : vector<1x1x8x256xf32> to vector<1x8x256xf32>
    %29 = vector.shape_cast %26 : vector<1x8x256xf32> to vector<1x1x8x256xf32>
    tpu.vector_store %arg8[%c0_15, %c2, %c0_16, %c0_17], %29 {strides = array<i32>} : memref<1x3x8x256xf32, #tpu.memory_space<vmem>>, vector<1x1x8x256xf32>,
    return
  }
  func.func @transform_0(%arg0: i32, %arg1: i32, %arg2: i32) -> (i32, i32) {
    %c0_i32 = arith.constant 0 : i32
    %c0_i32_0 = arith.constant 0 : i32
    %c0_i32_1 = arith.constant 0 : i32
    return %c0_i32, %c0_i32_0 : i32, i32
  }
  func.func @transform_1(%arg0: i32, %arg1: i32, %arg2: i32) -> (i32, i32) {
    %c0_i32 = arith.constant 0 : i32
    %c0_i32_0 = arith.constant 0 : i32
    %c0_i32_1 = arith.constant 0 : i32
    return %c0_i32, %c0_i32_0 : i32, i32
  }
  func.func @transform_2(%arg0: i32, %arg1: i32, %arg2: i32) -> (i32, i32) {
    %c0_i32 = arith.constant 0 : i32
    %c0_i32_0 = arith.constant 0 : i32
    %c0_i32_1 = arith.constant 0 : i32
    return %c0_i32, %c0_i32_0 : i32, i32
  }
  func.func @transform_3(%arg0: i32, %arg1: i32, %arg2: i32) -> (i32, i32) {
    %c0_i32 = arith.constant 0 : i32
    %c0_i32_0 = arith.constant 0 : i32
    %c0_i32_1 = arith.constant 0 : i32
    return %c0_i32, %c0_i32_0 : i32, i32
  }
  func.func @transform_4(%arg0: i32, %arg1: i32, %arg2: i32) -> (i32, i32, i32) {
    %c0_i32 = arith.constant 0 : i32
    return %arg0, %arg1, %arg2 : i32, i32, i32
  }
  func.func @transform_5(%arg0: i32, %arg1: i32, %arg2: i32) -> (i32, i32, i32, i32) {
    %c0_i32 = arith.constant 0 : i32
    %c0_i32_0 = arith.constant 0 : i32
    return %arg0, %c0_i32, %arg1, %arg2 : i32, i32, i32, i32
  }
}

</mosaic_0001>

<llo_original>
// kernel: tpu_custom_call.1
$region0: #{tpu_custom_call.1}
  #allocation0 [shape = 'u32[]', space=smem, size = 0x4, offset = 0x4, fixed_abs, tag = 'smem constant byte address 0x4 - core index']
  #allocation1 [shape = 'u32[144,128]{1,0:T(1,128)}', space=vmem, size = 0x12000, scoped, tag = 'internal scratch']
  %s0 = inlined_call_operand.vmem [shape: f32[16,1], index: 0, kind: input, shape index: {}]
  %s1 = inlined_call_operand.vmem [shape: f32[16,1], index: 1, kind: input, shape index: {}]
  %s2 = inlined_call_operand.vmem [shape: f32[1,256], index: 2, kind: input, shape index: {}]
  %s3 = inlined_call_operand.vmem [shape: f32[1,256], index: 3, kind: input, shape index: {}]
  %s4 = inlined_call_operand.hbm [shape: f32[2,16,256], index: 4, kind: input, shape index: {}]
  %s5 = inlined_call_operand.hbm [shape: f32[2,3,16,256], index: 5, kind: output, shape index: {}]
  %s6 = sld [smem:[#allocation0]]
  $region57: #{tpu_custom_call.1} parent=0
    _
  %s8 = ssub.s32 1, %s6
  %s9 = scalar_select 0, %s8, %s6
  $region1: #{tpu_custom_call.1} parent=0
    #allocation2 [shape = 'u8[16384]{0}', space=vmem, size = 0x4000, scoped, tag = 'input window, operand 4']
    #allocation3 [shape = 's32[2]{0}', space=sflag, size = 0x8, scoped, tag = 'scoped memory for tpu_custom_call.1']
    #allocation4 [shape = 's32[2]{0}', space=sflag, size = 0x8, scoped, tag = 'scoped memory for tpu_custom_call.1']
    #allocation5 [shape = 'u8[49152]{0}', space=vmem, size = 0xc000, scoped, tag = 'output window, operand 0']
    %10 = vsyncpa [#allocation3], 0
    %s11 = scalar_lea.sflag [#allocation3], 1
    %12 = vsyncpa %s11, 0
    %13 = vsyncpa [#allocation4], 0
    %s14 = scalar_lea.sflag [#allocation4], 1
    %15 = vsyncpa %s14, 0
    loop: start=0, step=1, limit=6
    $region2: #{tpu_custom_call.1} parent=1 // loop_pre_header
      _
    $region3: #{tpu_custom_call.1} parent=1 // loop_header
      %s17 = sphi 0, %s21
      %p18 = scmp.ge.s32.totalorder %s17, 6
      %s24 = sphi 0, %s43
      %s25 = sphi 0, %s39
      %s26 = sphi 0, %s35
      %s27 = sphi 0, %s24
      %s28 = sphi 0, %s25
      %s29 = sphi 0, %s26
      %s30 = sphi 0, %s27
      %s31 = sphi 0, %s28
      %s32 = sphi 0, %s29
      %s44 = sphi 0, %s44
      %s46 = sphi 0, %s44
      %s47 = sphi 0, %s46
      %s61 = sphi 0, %s47
      %s65 = sphi 0, %s65
      %s67 = sphi 0, %s65
      %s68 = sphi 0, %s67
      %s82 = sphi 0, %s68
      %s86 = sphi 0, %s86
      %s88 = sphi 0, %s86
      %s89 = sphi 0, %s88
      %s103 = sphi 0, %s89
      %s107 = sphi 0, %s107
      %s109 = sphi 0, %s107
      %s110 = sphi 0, %s109
      %s124 = sphi 0, %s110
      %s134 = sphi 0, %s136
      %s137 = sphi 0, %s134
      %s138 = sphi 0, %s137
      %s154 = sphi 0, %s138
      %s164 = sphi 0, %s166
      %s167 = sphi 0, %s164
      %s168 = sphi 0, %s167
      %s184 = sphi 0, %s168
    $region4: #{tpu_custom_call.1} parent=1 // loop_header_branch
      %20 = sbr.rel (%p18) target = $region8
    $region5: #{tpu_custom_call.1} parent=1 // loop_body
      %s22 = ssub.s32 %s17, 1
      %s23 = ssub.s32 %s17, 2
      %s33 = sadd.s32 1, %s26
      %p34 = scmp.ge.s32.totalorder %s33, 1
      %s35 = scalar_select %p34, 0, %s33
      %s36 = sadd.s32 1, %s25
      %s37 = scalar_select %p34, %s36, %s25
      %p38 = scmp.ge.s32.totalorder %s37, 2
      %s39 = scalar_select %p38, 0, %s37
      %s40 = sadd.s32 1, %s24
      %s41 = scalar_select %p38, %s40, %s24
      %p42 = scmp.ge.s32.totalorder %s41, 2
      %s43 = scalar_select %p42, 0, %s41
      %s45 = sadd.s32 %s44, 1
      %p48 = scmp.eq.s32.totalorder %s17, 3
      %p49 = scmp.ne.s32.totalorder %s44, %s46
      %p50 = scmp.eq.s32.totalorder %s17, 0
      %p51 = por %p49, %p50
      %p52 = scmp.ne.s32.totalorder %s44, %s46
      %p53 = scmp.eq.s32.totalorder %s22, 3
      %p54 = por %p52, %p53
      %p55 = scmp.ne.s32.totalorder %s46, %s47
      %p56 = scmp.eq.s32.totalorder %s22, 0
      %p57 = por %p55, %p56
      %p58 = scmp.ne.s32.totalorder %s46, %s47
      %p59 = scmp.eq.s32.totalorder %s23, 3
      %p60 = por %p58, %p59
      %p62 = scmp.ne.s32.totalorder %s47, %s61
      %p63 = scmp.eq.s32.totalorder %s23, 0
      %p64 = por %p62, %p63
      %s66 = sadd.s32 %s65, 1
      %p69 = scmp.eq.s32.totalorder %s17, 3
      %p70 = scmp.ne.s32.totalorder %s65, %s67
      %p71 = scmp.eq.s32.totalorder %s17, 0
      %p72 = por %p70, %p71
      %p73 = scmp.ne.s32.totalorder %s65, %s67
      %p74 = scmp.eq.s32.totalorder %s22, 3
      %p75 = por %p73, %p74
      %p76 = scmp.ne.s32.totalorder %s67, %s68
      %p77 = scmp.eq.s32.totalorder %s22, 0
      %p78 = por %p76, %p77
      %p79 = scmp.ne.s32.totalorder %s67, %s68
      %p80 = scmp.eq.s32.totalorder %s23, 3
      %p81 = por %p79, %p80
      %p83 = scmp.ne.s32.totalorder %s68, %s82
      %p84 = scmp.eq.s32.totalorder %s23, 0
      %p85 = por %p83, %p84
      %s87 = sadd.s32 %s86, 1
      %p90 = scmp.eq.s32.totalorder %s17, 3
      %p91 = scmp.ne.s32.totalorder %s86, %s88
      %p92 = scmp.eq.s32.totalorder %s17, 0
      %p93 = por %p91, %p92
      %p94 = scmp.ne.s32.totalorder %s86, %s88
      %p95 = scmp.eq.s32.totalorder %s22, 3
      %p96 = por %p94, %p95
      %p97 = scmp.ne.s32.totalorder %s88, %s89
      %p98 = scmp.eq.s32.totalorder %s22, 0
      %p99 = por %p97, %p98
      %p100 = scmp.ne.s32.totalorder %s88, %s89
      %p101 = scmp.eq.s32.totalorder %s23, 3
      %p102 = por %p100, %p101
      %p104 = scmp.ne.s32.totalorder %s89, %s103
      %p105 = scmp.eq.s32.totalorder %s23, 0
      %p106 = por %p104, %p105
      %s108 = sadd.s32 %s107, 1
      %p111 = scmp.eq.s32.totalorder %s17, 3
      %p112 = scmp.ne.s32.totalorder %s107, %s109
      %p113 = scmp.eq.s32.totalorder %s17, 0
      %p114 = por %p112, %p113
      %p115 = scmp.ne.s32.totalorder %s107, %s109
      %p116 = scmp.eq.s32.totalorder %s22, 3
      %p117 = por %p115, %p116
      %p118 = scmp.ne.s32.totalorder %s109, %s110
      %p119 = scmp.eq.s32.totalorder %s22, 0
      %p120 = por %p118, %p119
      %p121 = scmp.ne.s32.totalorder %s109, %s110
      %p122 = scmp.eq.s32.totalorder %s23, 3
      %p123 = por %p121, %p122
      %p125 = scmp.ne.s32.totalorder %s110, %s124
      %p126 = scmp.eq.s32.totalorder %s23, 0
      %p127 = por %p125, %p126
      %s128 = ssub.s32 %s24, %s43
      %s129 = ssub.s32 %s25, %s39
      %s130 = sor.u32 %s128, %s129
      %s131 = ssub.s32 %s26, %s35
      %s132 = sor.u32 %s130, %s131
      %p133 = scmp.eq.s32.totalorder %s132, 0
      %s135 = sadd.s32 %s134, 1
      %s136 = scalar_select %p133, %s134, %s135
      %p139 = pneg %p133
      %p140 = scmp.eq.s32.totalorder %s17, 3
      %p141 = por %p139, %p140
      %p142 = scmp.ne.s32.totalorder %s134, %s137
      %p143 = scmp.eq.s32.totalorder %s17, 0
      %p144 = por %p142, %p143
      %p145 = scmp.ne.s32.totalorder %s134, %s137
      %p146 = scmp.eq.s32.totalorder %s22, 3
      %p147 = por %p145, %p146
      %p148 = scmp.ne.s32.totalorder %s137, %s138
      %p149 = scmp.eq.s32.totalorder %s22, 0
      %p150 = por %p148, %p149
      %p151 = scmp.ne.s32.totalorder %s137, %s138
      %p152 = scmp.eq.s32.totalorder %s23, 3
      %p153 = por %p151, %p152
      %p155 = scmp.ne.s32.totalorder %s138, %s154
      %p156 = scmp.eq.s32.totalorder %s23, 0
      %p157 = por %p155, %p156
      %s158 = ssub.s32 %s24, %s43
      %s159 = ssub.s32 %s25, %s39
      %s160 = sor.u32 %s158, %s159
      %s161 = ssub.s32 %s26, %s35
      %s162 = sor.u32 %s160, %s161
      %p163 = scmp.eq.s32.totalorder %s162, 0
      %s165 = sadd.s32 %s164, 1
      %s166 = scalar_select %p163, %s164, %s165
      %p169 = pneg %p163
      %p170 = scmp.eq.s32.totalorder %s17, 3
      %p171 = por %p169, %p170
      %p172 = scmp.ne.s32.totalorder %s164, %s167
      %p173 = scmp.eq.s32.totalorder %s17, 0
      %p174 = por %p172, %p173
      %p175 = scmp.ne.s32.totalorder %s164, %s167
      %p176 = scmp.eq.s32.totalorder %s22, 3
      %p177 = por %p175, %p176
      %p178 = scmp.ne.s32.totalorder %s167, %s168
      %p179 = scmp.eq.s32.totalorder %s22, 0
      %p180 = por %p178, %p179
      %p181 = scmp.ne.s32.totalorder %s167, %s168
      %p182 = scmp.eq.s32.totalorder %s23, 3
      %p183 = por %p181, %p182
      %p185 = scmp.ne.s32.totalorder %s168, %s184
      %p186 = scmp.eq.s32.totalorder %s23, 0
      %p187 = por %p185, %p186
      %p188 = scmp.le.s32.totalorder 1, %s17
      %p189 = scmp.lt.s32.totalorder %s17, 5
      %p190 = pnand %p188, %p189
      %p191 = pneg %p190
      // Predicated region
      $region9: #{tpu_custom_call.1} parent=5 // pred_check
        _
      $region10: #{tpu_custom_call.1} parent=5 // pred_check_branch
        %193 = sbr.rel (%p190) target = $region12
      $region11: #{tpu_custom_call.1} parent=5 // pred_region
        %s194 = ssub.s32 %s17, 1
        // Predicated region
        $region13: #{tpu_custom_call.1} parent=11 // pred_check
          %p195 = pneg %p57
        $region14: #{tpu_custom_call.1} parent=11 // pred_check_branch
          %197 = sbr.rel (%p195) target = $region16
        $region15: #{tpu_custom_call.1} parent=11 // pred_region
          _
        $region16: #{tpu_custom_call.1} parent=11 // pred_fallthru
          _
        // Predicated region
        $region17: #{tpu_custom_call.1} parent=11 // pred_check
          %p198 = pneg %p78
        $region18: #{tpu_custom_call.1} parent=11 // pred_check_branch
          %200 = sbr.rel (%p198) target = $region20
        $region19: #{tpu_custom_call.1} parent=11 // pred_region
          _
        $region20: #{tpu_custom_call.1} parent=11 // pred_fallthru
          _
        // Predicated region
        $region21: #{tpu_custom_call.1} parent=11 // pred_check
          %p201 = pneg %p99
        $region22: #{tpu_custom_call.1} parent=11 // pred_check_branch
          %203 = sbr.rel (%p201) target = $region24
        $region23: #{tpu_custom_call.1} parent=11 // pred_region
          _
        $region24: #{tpu_custom_call.1} parent=11 // pred_fallthru
          _
        // Predicated region
        $region25: #{tpu_custom_call.1} parent=11 // pred_check
          %p204 = pneg %p120
        $region26: #{tpu_custom_call.1} parent=11 // pred_check_branch
          %206 = sbr.rel (%p204) target = $region28
        $region27: #{tpu_custom_call.1} parent=11 // pred_region
          _
        $region28: #{tpu_custom_call.1} parent=11 // pred_fallthru
          _
      $region12: #{tpu_custom_call.1} parent=5 // pred_fallthru
        _
      %p207 = scmp.lt.s32.totalorder %s17, 4
      // Predicated region
      $region29: #{tpu_custom_call.1} parent=5 // pred_check
        %p208 = pneg %p207
      $region30: #{tpu_custom_call.1} parent=5 // pred_check_branch
        %210 = sbr.rel (%p208) target = $region32
      $region31: #{tpu_custom_call.1} parent=5 // pred_region
        // Predicated region
        $region33: #{tpu_custom_call.1} parent=31 // pred_check
          %p211 = pneg %p144
        $region34: #{tpu_custom_call.1} parent=31 // pred_check_branch
          %213 = sbr.rel (%p211) target = $region36
        $region35: #{tpu_custom_call.1} parent=31 // pred_region
          %s214 = sand.u32 %s134, 1
          %s215 = scalar_lea.sflag [#allocation3], %s214
          %s216 = sand.u32 %s134, 1
          %s217 = smul.addr %s216, 16
          %s218 = scalar_lea.vmem [#allocation2], %s217
          %s219 = smul.u32 2, %s26
          %s221 = ssub.s32 256, 256
          %222 = vsyncadd %s215, %s221
          %s223 = smul.addr %s25, 2
          %s224 = sadd.s32 %s219, %s223
          %s225 = smul.addr %s24, 4
          %s226 = sadd.s32 %s224, %s225
          %s227 = smul.addr %s226, 128
          %s228 = scalar_lea.hbm %s4, %s227
          %s230 = sshll.u32 %s218, 4
          %s231 = int_to_ptr.vmem [resolvable:$true] %s230
          %233 = dma.hbm_to_vmem [thread:$0]  %s228, 256, %s231, %s215
        $region36: #{tpu_custom_call.1} parent=31 // pred_fallthru
          _
      $region32: #{tpu_custom_call.1} parent=5 // pred_fallthru
        _
      %p234 = scmp.le.s32.totalorder 1, %s17
      %p235 = scmp.lt.s32.totalorder %s17, 5
      %p236 = pnand %p234, %p235
      %p237 = pneg %p236
      // Predicated region
      $region37: #{tpu_custom_call.1} parent=5 // pred_check
        _
      $region38: #{tpu_custom_call.1} parent=5 // pred_check_branch
        %239 = sbr.rel (%p236) target = $region40
      $region39: #{tpu_custom_call.1} parent=5 // pred_region
        %s240 = ssub.s32 %s17, 1
        %s241 = sand.u32 %s137, 1
        %s242 = scalar_lea.sflag [#allocation3], %s241
        %s243 = sand.u32 %s137, 1
        %s244 = smul.addr %s243, 16
        %s245 = scalar_lea.vmem [#allocation2], %s244
        // Predicated region
        $region41: #{tpu_custom_call.1} parent=39 // pred_check
          %p246 = pneg %p150
        $region42: #{tpu_custom_call.1} parent=39 // pred_check_branch
          %248 = sbr.rel (%p246) target = $region44
        $region43: #{tpu_custom_call.1} parent=39 // pred_region
          %249 = dma.done %s242, 256
        $region44: #{tpu_custom_call.1} parent=39 // pred_fallthru
          _
        %p250 = pneg %p57
        %p251 = pneg %p54
        %p252 = pneg %p78
        %p253 = pneg %p75
        %p254 = pneg %p99
        %p255 = pneg %p96
        %p256 = pneg %p120
        %p257 = pneg %p117
        %s258 = sand.u32 %s137, 1
        %s259 = scalar_lea.sflag [#allocation3], %s258
        %s260 = sand.u32 %s137, 1
        %s261 = smul.addr %s260, 16
        %s262 = scalar_lea.vmem [#allocation2], %s261
        %p263 = pneg %p150
        %p264 = pneg %p147
        %p265 = pneg %p180
        %p266 = pneg %p177
        %s267 = sand.u32 %s167, 1
        %s268 = scalar_lea.sflag [#allocation4], %s267
        %s269 = sand.u32 %s167, 1
        %s270 = smul.addr %s269, 48
        %s271 = scalar_lea.vmem [#allocation5], %s270
        %s272 = smul.u32 2, %s29
        %s273 = smul.u32 2, %s29
        %s274 = smul.u32 %s28, 8
        %s275 = scalar_lea.vmem %s0, %s274
        %v276 = vld [vmem:[%s275] sm:$0xff]
        %s277 = scalar_lea.vmem %s1, %s274
        %v278 = vld [vmem:[%s277] sm:$0xff]
        %v279 = vld [vmem:[%s2] sm:$0x3]
        %v280 = vld [vmem:[%s3] sm:$0x3]
        %v281 = vld [vmem:[%s245] sm:$0xff]
        %v282 = vld [vmem:[%s245 + $0x8] sm:$0xff]
        %284 = vset.pattern.permute.xlu0 0
        %285 = vperm.xlu0 %284, %v276
        %v286 = vpop.permute.xlu0 %285
        %v288 = vmul.f32 %v281, %v286
        %v289 = vmul.f32 %v282, %v286
        %v291 = vlaneseq
        %v292 = vshrl.u32 %v291, 7
        %v293 = vsub.s32 0, %v292
        %v294 = vrot.slane %v279, %v293
        %v295 = vlaneseq
        %v296 = vshrl.u32 %v295, 7
        %v297 = vsub.s32 1, %v296
        %v298 = vrot.slane %v279, %v297
        %v301 = vmul.f32 %v288, %v294
        %v302 = vmul.f32 %v289, %v298
        %303 = vst [vmem:[%s271] sm:$0xff] %v301
        %304 = vst [vmem:[%s271 + $0x8] sm:$0xff] %v302
        %306 = vset.pattern.permute.xlu0 0
        %307 = vperm.xlu0 %306, %v278
        %v308 = vpop.permute.xlu0 %307
        %v310 = vmul.f32 %v281, %v308
        %v311 = vmul.f32 %v282, %v308
        %s312 = scalar_lea.vmem %s271, 16 [#allocation5]
        %313 = vst [vmem:[%s312] sm:$0xff] %v310
        %314 = vst [vmem:[%s312 + $0x8] sm:$0xff] %v311
        %v316 = vlaneseq
        %v317 = vshrl.u32 %v316, 7
        %v318 = vsub.s32 0, %v317
        %v319 = vrot.slane %v280, %v318
        %v320 = vlaneseq
        %v321 = vshrl.u32 %v320, 7
        %v322 = vsub.s32 1, %v321
        %v323 = vrot.slane %v280, %v322
        %v326 = vmul.f32 %v288, %v319
        %v327 = vmul.f32 %v289, %v323
        %s328 = scalar_lea.vmem %s271, 32 [#allocation5]
        %329 = vst [vmem:[%s328] sm:$0xff] %v326
        %330 = vst [vmem:[%s328 + $0x8] sm:$0xff] %v327
        %s331 = sand.u32 %s167, 1
        %s332 = scalar_lea.sflag [#allocation4], %s331
        %s333 = sand.u32 %s167, 1
        %s334 = smul.addr %s333, 48
        %s335 = scalar_lea.vmem [#allocation5], %s334
        // Predicated region
        $region45: #{tpu_custom_call.1} parent=39 // pred_check
          %p336 = pneg %p177
        $region46: #{tpu_custom_call.1} parent=39 // pred_check_branch
          %338 = sbr.rel (%p336) target = $region48
        $region47: #{tpu_custom_call.1} parent=39 // pred_region
          %s339 = smul.u32 2, %s29
          %s341 = ssub.s32 768, 768
          %342 = vsyncadd %s332, %s341
          %s343 = smul.addr %s28, 2
          %s344 = sadd.s32 %s339, %s343
          %s345 = smul.addr %s27, 12
          %s346 = sadd.s32 %s344, %s345
          %s347 = smul.addr %s346, 128
          %s348 = scalar_lea.hbm %s5, %s347
          %s349 = sshll.u32 %s335, 4
          %s350 = int_to_ptr.vmem [resolvable:$true] %s349
          %355 = dma.vmem_to_hbm [thread:$0]  %s350, 768, %s348, %s332, 256, 512, 16
        $region48: #{tpu_custom_call.1} parent=39 // pred_fallthru
          _
      $region40: #{tpu_custom_call.1} parent=5 // pred_fallthru
        _
      %p356 = scmp.le.s32.totalorder 2, %s17
      // Predicated region
      $region49: #{tpu_custom_call.1} parent=5 // pred_check
        %p357 = pneg %p356
      $region50: #{tpu_custom_call.1} parent=5 // pred_check_branch
        %359 = sbr.rel (%p357) target = $region52
      $region51: #{tpu_custom_call.1} parent=5 // pred_region
        %s360 = ssub.s32 %s17, 2
        // Predicated region
        $region53: #{tpu_custom_call.1} parent=51 // pred_check
          %p361 = pneg %p183
        $region54: #{tpu_custom_call.1} parent=51 // pred_check_branch
          %363 = sbr.rel (%p361) target = $region56
        $region55: #{tpu_custom_call.1} parent=51 // pred_region
          %s364 = sand.u32 %s168, 1
          %s365 = scalar_lea.sflag [#allocation4], %s364
          %s366 = sand.u32 %s168, 1
          %s367 = smul.addr %s366, 48
          %s368 = scalar_lea.vmem [#allocation5], %s367
          %369 = dma.done %s365, 768
        $region56: #{tpu_custom_call.1} parent=51 // pred_fallthru
          _
      $region52: #{tpu_custom_call.1} parent=5 // pred_fallthru
        _
    $region6: #{tpu_custom_call.1} parent=1 // loop_footer
      %s21 = sadd.s32 1, %s17
    $region7: #{tpu_custom_call.1} parent=1 // loop_footer_branch
      %16 = sbr.rel target = $region3
    $region8: #{tpu_custom_call.1} parent=1 // loop_exit
      _
    %370 = vsyncpa [#allocation3], 1
    %s371 = scalar_lea.sflag [#allocation3], 1
    %372 = vsyncpa %s371, 1
    %373 = vsyncpa [#allocation4], 1
    %s374 = scalar_lea.sflag [#allocation4], 1
    %375 = vsyncpa %s374, 1

</llo_original>
